<compile_context>
chip_gen: v5e
topology: v5e:2x2
jax: 0.10.0
libtpu: 0.0.40
codegen_flags: <defaults>
</compile_context>

<pallas_src>
import jax
import jax.numpy as jnp
from jax import lax
from jax.experimental import pallas as pl
from jax.experimental.pallas import tpu as pltpu

_LANE = 128
_SUBLANE = 8
_VMEM_WORKING_BUDGET = 40 * 1024 * 1024   # double-buffered activation footprint target
_VMEM_LIMIT_BYTES = 48 * 1024 * 1024      # <= v7x physical 64 MiB/TC; > v5e/v6e scoped defaults
_MIN_GRID_STEPS = 4                       # keep the pipeline / both v7x TCs fed when possible
_SMALL_STEP_BYTES = 1 << 20               # fold batches while a step moves < 1 MiB of real data


def _round_up(x, m):
    return ((x + m - 1) // m) * m


def _divisor_tiles(hw_pad):
    """Multiples of 128 that divide hw_pad, descending."""
    m = hw_pad // _LANE
    return [_LANE * d for d in range(m, 0, -1) if m % d == 0]


def _choose_tiling(n, hw_pad, cin, cout, in_bytes, out_bytes):
    """Pick (spatial tile, batch-block) from the VMEM budget + grid-step heuristics."""
    sub_in = _round_up(cin, _SUBLANE)      # VMEM blocks are padded to 8 sublanes
    sub_out = _round_up(cout, _SUBLANE)
    per_pixel = 2 * (sub_in * in_bytes + sub_out * out_bytes)   # double-buffered bytes / pixel

    tiles = _divisor_tiles(hw_pad)
    # Largest lane-dense tile whose double-buffered footprint fits the budget.
    tile = next((t for t in tiles if per_pixel * t <= _VMEM_WORKING_BUDGET), tiles[-1])
    # Keep enough grid steps for megacore sharding / DMA-compute overlap, if the image allows.
    while n * (hw_pad // tile) < _MIN_GRID_STEPS:
        smaller = [t for t in tiles if t < tile]
        if not smaller:
            break
        tile = smaller[0]

    # Fold batch elements per step while steps would otherwise be tiny.
    nb = 1
    raw_step = (cin * in_bytes + cout * out_bytes) * tile   # real HBM bytes per step per batch
    base_steps = n * (hw_pad // tile)
    for cand in range(2, n + 1):
        if n % cand:
            continue
        if per_pixel * tile * cand > _VMEM_WORKING_BUDGET:
            break
        if raw_step * cand > _SMALL_STEP_BYTES:
            break
        if (n // cand) * (hw_pad // tile) < min(_MIN_GRID_STEPS, base_steps):
            break
        nb = cand
    return tile, nb


def _make_kernel(nb):
    def outconv_kernel(x_ref, w_ref, b_ref, o_ref):
        # x_ref: (nb, Cin, T)   activations, pixels on lanes, native dtype
        # w_ref: (Cout, Cin)    1x1 conv weight (resident)
        # b_ref: (Cout, 1)      bias, f32 (added to the f32 accumulator)
        # o_ref: (nb, Cout, T)
        w = w_ref[...]
        b = b_ref[...]
        for i in range(nb):   # nb is small and static -> unrolled, stays 2D MXU dots
            y = jnp.dot(w, x_ref[i], preferred_element_type=jnp.float32)
            o_ref[i] = (y + b).astype(o_ref.dtype)
    return outconv_kernel


def out_conv(x_nchw, w_oihw, bias):
    """Pallas implementation of OutConv.forward (1x1 Conv2d + bias), NCHW in/out."""
    N, Cin, H, W = x_nchw.shape
    Cout = w_oihw.shape[0]
    HW = H * W
    hw_pad = _round_up(HW, _LANE)

    x = x_nchw.reshape(N, Cin, HW)                   # free reshape, keep native dtype
    if hw_pad != HW:
        # Lane-dense padding: avoids masked partial stores on the output.
        x = jnp.pad(x, ((0, 0), (0, 0), (0, hw_pad - HW)))

    w = w_oihw.reshape(Cout, Cin).astype(x.dtype)    # (O, I, 1, 1) -> (O, I)
    b = bias.reshape(Cout, 1).astype(jnp.float32)    # added in f32

    out_dtype = x_nchw.dtype
    in_bytes = x.dtype.itemsize
    out_bytes = jnp.dtype(out_dtype).itemsize
    tile, nb = _choose_tiling(N, hw_pad, Cin, Cout, in_bytes, out_bytes)
    grid = (N // nb, hw_pad // tile)

    cost = pl.CostEstimate(
        flops=2 * N * HW * Cin * Cout,
        transcendentals=0,
        bytes_accessed=N * HW * (Cin * in_bytes + Cout * out_bytes)
                       + Cout * Cin * in_bytes + Cout * 4,
    )

    out = pl.pallas_call(
        _make_kernel(nb),
        out_shape=jax.ShapeDtypeStruct((N, Cout, hw_pad), out_dtype),
        grid=grid,
        in_specs=[
            pl.BlockSpec((nb, Cin, tile), lambda n, s: (n, 0, s)),   # activations, pipelined
            pl.BlockSpec((Cout, Cin), lambda n, s: (0, 0)),          # weight (resident)
            pl.BlockSpec((Cout, 1), lambda n, s: (0, 0)),            # bias   (resident)
        ],
        out_specs=pl.BlockSpec((nb, Cout, tile), lambda n, s: (n, 0, s)),
        compiler_params=pltpu.CompilerParams(
            dimension_semantics=("parallel", "parallel"),
            vmem_limit_bytes=_VMEM_LIMIT_BYTES,
        ),
        cost_estimate=cost,
    )(x, w, b)

    if hw_pad != HW:
        out = out[:, :, :HW]
    return out.reshape(N, Cout, H, W)


def ref_out_conv(x, w, b):
    """Pure-JAX (XLA conv) reference for correctness checking."""
    y = lax.conv_general_dilated(x, w, (1, 1), 'VALID',
                                 dimension_numbers=('NCHW', 'OIHW', 'NCHW'))
    return y + b.reshape(1, -1, 1, 1)


if __name__ == "__main__":
    N, Cin, H, W = 2, 4, 16, 16
    Cout = 3  # OutConv(in_channels=4, out_channels=3)

    key = jax.random.PRNGKey(0)
    kx, kw, kb = jax.random.split(key, 3)

    x = jax.random.normal(kx, (N, Cin, H, W), jnp.float32)
    w = 0.1 * jax.random.normal(kw, (Cout, Cin, 1, 1), jnp.float32)   # Conv2d weight OIHW
    b = 0.1 * jax.random.normal(kb, (Cout,), jnp.float32)             # Conv2d bias

    out = jax.block_until_ready(out_conv(x, w, b))
    ref = jax.block_until_ready(ref_out_conv(x, w, b))

    assert out.shape == (N, Cout, H, W)
    assert out.dtype == x.dtype
    assert jnp.allclose(out, ref, rtol=1e-5, atol=1e-5), (
        float(jnp.max(jnp.abs(out - ref))))

    print("KERNEL_OK")
</pallas_src>

<mosaic_0001>
module attributes {stable_mosaic.version = 11 : i64} {
  func.func @outconv_kernel(%arg0: i32, %arg1: i32, %arg2: memref<1x4x128xf32, #tpu.memory_space<vmem>>, %arg3: memref<3x4xf32, #tpu.memory_space<vmem>>, %arg4: memref<3x1xf32, #tpu.memory_space<vmem>>, %arg5: memref<1x3x128xf32, #tpu.memory_space<vmem>>) attributes {dimension_semantics = [#tpu.dimension_semantics<parallel>, #tpu.dimension_semantics<parallel>], iteration_bounds = array<i64: 2, 2>, scalar_prefetch = 0 : i64, scratch_operands = 0 : i64, tpu.core_type = #tpu.core_type<tc>, window_params = [{transform_indices = @transform_0, window_bounds = array<i64: 1, 4, 128>}, {pipeline_mode = #tpu.pipeline_mode<synchronous>, transform_indices = @transform_1, window_bounds = array<i64: 3, 4>}, {pipeline_mode = #tpu.pipeline_mode<synchronous>, transform_indices = @transform_2, window_bounds = array<i64: 3, 1>}, {transform_indices = @transform_3, window_bounds = array<i64: 1, 3, 128>}]} {
    %c0 = arith.constant 0 : index
    %c0_0 = arith.constant 0 : index
    %0 = vector.load %arg3[%c0, %c0_0] : memref<3x4xf32, #tpu.memory_space<vmem>>, vector<3x4xf32>
    %c0_1 = arith.constant 0 : index
    %c0_2 = arith.constant 0 : index
    %1 = vector.load %arg4[%c0_1, %c0_2] : memref<3x1xf32, #tpu.memory_space<vmem>>, vector<3x1xf32>
    %c0_3 = arith.constant 0 : index
    %c0_4 = arith.constant 0 : index
    %c0_5 = arith.constant 0 : index
    %2 = vector.load %arg2[%c0_3, %c0_4, %c0_5] : memref<1x4x128xf32, #tpu.memory_space<vmem>>, vector<1x4x128xf32>
    %3 = vector.shape_cast %2 : vector<1x4x128xf32> to vector<4x128xf32>
    %cst = arith.constant dense<0.000000e+00> : vector<3x128xf32>
    %4 = tpu.matmul %0, %3, %cst {dimension_numbers = #tpu.dot_dimension_numbers<[1], [0], [0], [1], [0, 0, 1, 1], [], []>} : vector<3x4xf32>, vector<4x128xf32>, vector<3x128xf32> -> vector<3x128xf32>
    %5 = vector.broadcast %1 : vector<3x1xf32> to vector<3x128xf32>
    %6 = arith.addf %4, %5 : vector<3x128xf32>
    %c0_6 = arith.constant 0 : index
    %c0_7 = arith.constant 0 : index
    %c0_8 = arith.constant 0 : index
    %7 = vector.load %arg5[%c0_6, %c0_7, %c0_8] : memref<1x3x128xf32, #tpu.memory_space<vmem>>, vector<1x3x128xf32>
    %8 = vector.shape_cast %7 : vector<1x3x128xf32> to vector<3x128xf32>
    %9 = vector.shape_cast %6 : vector<3x128xf32> to vector<1x3x128xf32>
    tpu.vector_store %arg5[%c0_6, %c0_7, %c0_8], %9 {strides = array<i32>} : memref<1x3x128xf32, #tpu.memory_space<vmem>>, vector<1x3x128xf32>,
    return
  }
  func.func @transform_0(%arg0: i32, %arg1: i32) -> (i32, i32, i32) {
    %c0_i32 = arith.constant 0 : i32
    %c0_i32_0 = arith.constant 0 : i32
    return %arg0, %c0_i32, %arg1 : i32, i32, i32
  }
  func.func @transform_1(%arg0: i32, %arg1: i32) -> (i32, i32) {
    %c0_i32 = arith.constant 0 : i32
    %c0_i32_0 = arith.constant 0 : i32
    %c0_i32_1 = arith.constant 0 : i32
    return %c0_i32, %c0_i32_0 : i32, i32
  }
  func.func @transform_2(%arg0: i32, %arg1: i32) -> (i32, i32) {
    %c0_i32 = arith.constant 0 : i32
    %c0_i32_0 = arith.constant 0 : i32
    %c0_i32_1 = arith.constant 0 : i32
    return %c0_i32, %c0_i32_0 : i32, i32
  }
  func.func @transform_3(%arg0: i32, %arg1: i32) -> (i32, i32, i32) {
    %c0_i32 = arith.constant 0 : i32
    %c0_i32_0 = arith.constant 0 : i32
    return %arg0, %c0_i32, %arg1 : i32, i32, i32
  }
}

</mosaic_0001>

<llo_original>
// kernel: tpu_custom_call.1
$region0: #{tpu_custom_call.1}
  #allocation0 [shape = 'u32[]', space=smem, size = 0x4, offset = 0x4, fixed_abs, tag = 'smem constant byte address 0x4 - core index']
  #allocation1 [shape = 'u32[72,128]{1,0:T(1,128)}', space=vmem, size = 0x9000, scoped, tag = 'internal scratch']
  %s0 = inlined_call_operand.hbm [shape: f32[2,4,256], index: 0, kind: input, shape index: {}]
  %s1 = inlined_call_operand.vmem [shape: f32[3,4], index: 1, kind: input, shape index: {}]
  %s2 = inlined_call_operand.vmem [shape: f32[3,1], index: 2, kind: input, shape index: {}]
  %s3 = inlined_call_operand.vmem [shape: f32[2,3,256], index: 3, kind: output, shape index: {}]
  %s4 = sld [smem:[#allocation0]]
  $region49: #{tpu_custom_call.1} parent=0
    _
  %s6 = ssub.s32 1, %s4
  %s7 = scalar_select 0, %s6, %s4
  $region1: #{tpu_custom_call.1} parent=0
    #allocation2 [shape = 'u8[4096]{0}', space=vmem, size = 0x1000, scoped, tag = 'input window, operand 0']
    #allocation3 [shape = 's32[2]{0}', space=sflag, size = 0x8, scoped, tag = 'scoped memory for tpu_custom_call.1']
    %8 = vsyncpa [#allocation3], 0
    %s9 = scalar_lea.sflag [#allocation3], 1
    %10 = vsyncpa %s9, 0
    loop: start=0, step=1, limit=6
    $region2: #{tpu_custom_call.1} parent=1 // loop_pre_header
      _
    $region3: #{tpu_custom_call.1} parent=1 // loop_header
      %s12 = sphi 0, %s16
      %p13 = scmp.ge.s32.totalorder %s12, 6
      %s19 = sphi 0, %s31
      %s20 = sphi 0, %s27
      %s21 = sphi 0, %s19
      %s22 = sphi 0, %s20
      %s23 = sphi 0, %s21
      %s24 = sphi 0, %s22
      %s36 = sphi 0, %s38
      %s39 = sphi 0, %s36
      %s40 = sphi 0, %s39
      %s56 = sphi 0, %s40
      %s60 = sphi 0, %s60
      %s62 = sphi 0, %s60
      %s63 = sphi 0, %s62
      %s77 = sphi 0, %s63
      %s81 = sphi 0, %s81
      %s83 = sphi 0, %s81
      %s84 = sphi 0, %s83
      %s98 = sphi 0, %s84
      %s106 = sphi 0, %s108
      %s109 = sphi 0, %s106
      %s110 = sphi 0, %s109
      %s126 = sphi 0, %s110
    $region4: #{tpu_custom_call.1} parent=1 // loop_header_branch
      %15 = sbr.rel (%p13) target = $region8
    $region5: #{tpu_custom_call.1} parent=1 // loop_body
      %s17 = ssub.s32 %s12, 1
      %s18 = ssub.s32 %s12, 2
      %s25 = sadd.s32 1, %s20
      %p26 = scmp.ge.s32.totalorder %s25, 2
      %s27 = scalar_select %p26, 0, %s25
      %s28 = sadd.s32 1, %s19
      %s29 = scalar_select %p26, %s28, %s19
      %p30 = scmp.ge.s32.totalorder %s29, 2
      %s31 = scalar_select %p30, 0, %s29
      %s32 = ssub.s32 %s19, %s31
      %s33 = ssub.s32 %s20, %s27
      %s34 = sor.u32 %s32, %s33
      %p35 = scmp.eq.s32.totalorder %s34, 0
      %s37 = sadd.s32 %s36, 1
      %s38 = scalar_select %p35, %s36, %s37
      %p41 = pneg %p35
      %p42 = scmp.eq.s32.totalorder %s12, 3
      %p43 = por %p41, %p42
      %p44 = scmp.ne.s32.totalorder %s36, %s39
      %p45 = scmp.eq.s32.totalorder %s12, 0
      %p46 = por %p44, %p45
      %p47 = scmp.ne.s32.totalorder %s36, %s39
      %p48 = scmp.eq.s32.totalorder %s17, 3
      %p49 = por %p47, %p48
      %p50 = scmp.ne.s32.totalorder %s39, %s40
      %p51 = scmp.eq.s32.totalorder %s17, 0
      %p52 = por %p50, %p51
      %p53 = scmp.ne.s32.totalorder %s39, %s40
      %p54 = scmp.eq.s32.totalorder %s18, 3
      %p55 = por %p53, %p54
      %p57 = scmp.ne.s32.totalorder %s40, %s56
      %p58 = scmp.eq.s32.totalorder %s18, 0
      %p59 = por %p57, %p58
      %s61 = sadd.s32 %s60, 1
      %p64 = scmp.eq.s32.totalorder %s12, 3
      %p65 = scmp.ne.s32.totalorder %s60, %s62
      %p66 = scmp.eq.s32.totalorder %s12, 0
      %p67 = por %p65, %p66
      %p68 = scmp.ne.s32.totalorder %s60, %s62
      %p69 = scmp.eq.s32.totalorder %s17, 3
      %p70 = por %p68, %p69
      %p71 = scmp.ne.s32.totalorder %s62, %s63
      %p72 = scmp.eq.s32.totalorder %s17, 0
      %p73 = por %p71, %p72
      %p74 = scmp.ne.s32.totalorder %s62, %s63
      %p75 = scmp.eq.s32.totalorder %s18, 3
      %p76 = por %p74, %p75
      %p78 = scmp.ne.s32.totalorder %s63, %s77
      %p79 = scmp.eq.s32.totalorder %s18, 0
      %p80 = por %p78, %p79
      %s82 = sadd.s32 %s81, 1
      %p85 = scmp.eq.s32.totalorder %s12, 3
      %p86 = scmp.ne.s32.totalorder %s81, %s83
      %p87 = scmp.eq.s32.totalorder %s12, 0
      %p88 = por %p86, %p87
      %p89 = scmp.ne.s32.totalorder %s81, %s83
      %p90 = scmp.eq.s32.totalorder %s17, 3
      %p91 = por %p89, %p90
      %p92 = scmp.ne.s32.totalorder %s83, %s84
      %p93 = scmp.eq.s32.totalorder %s17, 0
      %p94 = por %p92, %p93
      %p95 = scmp.ne.s32.totalorder %s83, %s84
      %p96 = scmp.eq.s32.totalorder %s18, 3
      %p97 = por %p95, %p96
      %p99 = scmp.ne.s32.totalorder %s84, %s98
      %p100 = scmp.eq.s32.totalorder %s18, 0
      %p101 = por %p99, %p100
      %s102 = ssub.s32 %s19, %s31
      %s103 = ssub.s32 %s20, %s27
      %s104 = sor.u32 %s102, %s103
      %p105 = scmp.eq.s32.totalorder %s104, 0
      %s107 = sadd.s32 %s106, 1
      %s108 = scalar_select %p105, %s106, %s107
      %p111 = pneg %p105
      %p112 = scmp.eq.s32.totalorder %s12, 3
      %p113 = por %p111, %p112
      %p114 = scmp.ne.s32.totalorder %s106, %s109
      %p115 = scmp.eq.s32.totalorder %s12, 0
      %p116 = por %p114, %p115
      %p117 = scmp.ne.s32.totalorder %s106, %s109
      %p118 = scmp.eq.s32.totalorder %s17, 3
      %p119 = por %p117, %p118
      %p120 = scmp.ne.s32.totalorder %s109, %s110
      %p121 = scmp.eq.s32.totalorder %s17, 0
      %p122 = por %p120, %p121
      %p123 = scmp.ne.s32.totalorder %s109, %s110
      %p124 = scmp.eq.s32.totalorder %s18, 3
      %p125 = por %p123, %p124
      %p127 = scmp.ne.s32.totalorder %s110, %s126
      %p128 = scmp.eq.s32.totalorder %s18, 0
      %p129 = por %p127, %p128
      %p130 = scmp.le.s32.totalorder 1, %s12
      %p131 = scmp.lt.s32.totalorder %s12, 5
      %p132 = pnand %p130, %p131
      %p133 = pneg %p132
      // Predicated region
      $region9: #{tpu_custom_call.1} parent=5 // pred_check
        _
      $region10: #{tpu_custom_call.1} parent=5 // pred_check_branch
        %135 = sbr.rel (%p132) target = $region12
      $region11: #{tpu_custom_call.1} parent=5 // pred_region
        %s136 = ssub.s32 %s12, 1
        // Predicated region
        $region13: #{tpu_custom_call.1} parent=11 // pred_check
          %p137 = pneg %p73
        $region14: #{tpu_custom_call.1} parent=11 // pred_check_branch
          %139 = sbr.rel (%p137) target = $region16
        $region15: #{tpu_custom_call.1} parent=11 // pred_region
          _
        $region16: #{tpu_custom_call.1} parent=11 // pred_fallthru
          _
        // Predicated region
        $region17: #{tpu_custom_call.1} parent=11 // pred_check
          %p140 = pneg %p94
        $region18: #{tpu_custom_call.1} parent=11 // pred_check_branch
          %142 = sbr.rel (%p140) target = $region20
        $region19: #{tpu_custom_call.1} parent=11 // pred_region
          _
        $region20: #{tpu_custom_call.1} parent=11 // pred_fallthru
          _
      $region12: #{tpu_custom_call.1} parent=5 // pred_fallthru
        _
      %p143 = scmp.lt.s32.totalorder %s12, 4
      // Predicated region
      $region21: #{tpu_custom_call.1} parent=5 // pred_check
        %p144 = pneg %p143
      $region22: #{tpu_custom_call.1} parent=5 // pred_check_branch
        %146 = sbr.rel (%p144) target = $region24
      $region23: #{tpu_custom_call.1} parent=5 // pred_region
        // Predicated region
        $region25: #{tpu_custom_call.1} parent=23 // pred_check
          %p147 = pneg %p46
        $region26: #{tpu_custom_call.1} parent=23 // pred_check_branch
          %149 = sbr.rel (%p147) target = $region28
        $region27: #{tpu_custom_call.1} parent=23 // pred_region
          %s150 = sand.u32 %s36, 1
          %s151 = scalar_lea.sflag [#allocation3], %s150
          %s152 = sand.u32 %s36, 1
          %s153 = smul.addr %s152, 4
          %s154 = scalar_lea.vmem [#allocation2], %s153
          %156 = vsyncadd %s151, 0
          %s157 = smul.addr %s19, 2
          %s158 = sadd.s32 %s20, %s157
          %s159 = smul.addr %s158, 4
          %s160 = scalar_lea.hbm %s0, %s159
          %s162 = sshll.u32 %s160, 4
          %s163 = int_to_ptr.hbm [resolvable:$true] %s162
          %s164 = sshll.u32 %s154, 4
          %s165 = int_to_ptr.vmem [resolvable:$true] %s164
          %167 = dma.hbm_to_vmem [thread:$0]  %s163, 64, %s165, %s151
        $region28: #{tpu_custom_call.1} parent=23 // pred_fallthru
          _
      $region24: #{tpu_custom_call.1} parent=5 // pred_fallthru
        _
      %p168 = scmp.le.s32.totalorder 1, %s12
      %p169 = scmp.lt.s32.totalorder %s12, 5
      %p170 = pnand %p168, %p169
      %p171 = pneg %p170
      // Predicated region
      $region29: #{tpu_custom_call.1} parent=5 // pred_check
        _
      $region30: #{tpu_custom_call.1} parent=5 // pred_check_branch
        %173 = sbr.rel (%p170) target = $region32
      $region31: #{tpu_custom_call.1} parent=5 // pred_region
        %s174 = ssub.s32 %s12, 1
        %s175 = sand.u32 %s39, 1
        %s176 = scalar_lea.sflag [#allocation3], %s175
        %s177 = sand.u32 %s39, 1
        %s178 = smul.addr %s177, 4
        %s179 = scalar_lea.vmem [#allocation2], %s178
        // Predicated region
        $region33: #{tpu_custom_call.1} parent=31 // pred_check
          %p180 = pneg %p52
        $region34: #{tpu_custom_call.1} parent=31 // pred_check_branch
          %182 = sbr.rel (%p180) target = $region36
        $region35: #{tpu_custom_call.1} parent=31 // pred_region
          %184 = dma.done %s176, 64
        $region36: #{tpu_custom_call.1} parent=31 // pred_fallthru
          _
        %s185 = sand.u32 %s39, 1
        %s186 = scalar_lea.sflag [#allocation3], %s185
        %s187 = sand.u32 %s39, 1
        %s188 = smul.addr %s187, 4
        %s189 = scalar_lea.vmem [#allocation2], %s188
        %p190 = pneg %p52
        %p191 = pneg %p49
        %p192 = pneg %p73
        %p193 = pneg %p70
        %p194 = pneg %p94
        %p195 = pneg %p91
        %p196 = pneg %p122
        %p197 = pneg %p119
        %p198 = scmp.lt.s32.totalorder %s21, 1
        %s199 = scalar_select %p198, %s21, 1
        %p200 = scmp.lt.s32.totalorder %s22, 1
        %s201 = scalar_select %p200, %s22, 1
        %s202 = smul.addr %s199, 2
        %s203 = sadd.s32 %s201, %s202
        %s204 = smul.addr %s203, 4
        %s205 = scalar_lea.vmem %s3, %s204
        %p206 = scmp.lt.s32.totalorder %s21, 1
        %s207 = scalar_select %p206, %s21, 1
        %p208 = scmp.lt.s32.totalorder %s22, 1
        %s209 = scalar_select %p208, %s22, 1
        %s210 = smul.addr %s207, 2
        %s211 = sadd.s32 %s209, %s210
        %s212 = smul.addr %s211, 4
        %s213 = scalar_lea.vmem %s3, %s212
        %v214 = vld [vmem:[%s1] sm:$0x7]
        %v215 = vld [vmem:[%s2] sm:$0x7]
        %v216 = vld [vmem:[%s179] sm:$0xf]
        %218 = vset.pattern.permute.xlu0 0
        %219 = vperm.xlu0 %218, %v215
        %v220 = vpop.permute.xlu0 %219
        %vm222 = vcmask 31744
        %v224 = vsel %vm222, %v214, 0
        %vm226 = vcmask 1043456
        %v228 = vsel %vm226, %v216, 0
        %230 = vmatpush.msra.mxu0 0.0
        %231 = vmatpush.msra.mxu0 0.0
        %232 = vmatpush.msra.mxu0 0.0
        %233 = vmatpush.msra.mxu0 0.0
        %234 = vmatpush.msra.mxu0 0.0
        %235 = vmatpush.msra.mxu0 0.0
        %236 = vmatpush.msra.mxu0 0.0
        %237 = vmatpush.msra.mxu0 0.0
        %238 = vmatpush.msra.mxu0 0.0
        %239 = vmatpush.msra.mxu0 0.0
        %240 = vmatpush.msra.mxu0 0.0
        %241 = vmatpush.msra.mxu0 0.0
        %242 = vmatpush.msra.mxu0 0.0
        %243 = vmatpush.msra.mxu0 0.0
        %244 = vmatpush.msra.mxu0 0.0
        %245 = vmatpush.msra.mxu0 %v228
        %246 = vmatmul.f32.gmra.mxu0 %v224
        %v247 = vpop.f32.mrf.mxu0
        %v248 = vadd.f32 %v220, %v247
        %249 = vdwg.mxu0
        %250 = vst [vmem:[%s213] sm:$0x7] %v248
        %p251 = scmp.lt.s32.totalorder %s21, 1
        %s252 = scalar_select %p251, %s21, 1
        %p253 = scmp.lt.s32.totalorder %s22, 1
        %s254 = scalar_select %p253, %s22, 1
        %s255 = smul.addr %s252, 2
        %s256 = sadd.s32 %s254, %s255
        %s257 = smul.addr %s256, 4
        %s258 = scalar_lea.vmem %s3, %s257
        // Predicated region
        $region37: #{tpu_custom_call.1} parent=31 // pred_check
          %p259 = pneg %p119
        $region38: #{tpu_custom_call.1} parent=31 // pred_check_branch
          %261 = sbr.rel (%p259) target = $region40
        $region39: #{tpu_custom_call.1} parent=31 // pred_region
          _
        $region40: #{tpu_custom_call.1} parent=31 // pred_fallthru
          _
      $region32: #{tpu_custom_call.1} parent=5 // pred_fallthru
        _
      %p262 = scmp.le.s32.totalorder 2, %s12
      // Predicated region
      $region41: #{tpu_custom_call.1} parent=5 // pred_check
        %p263 = pneg %p262
      $region42: #{tpu_custom_call.1} parent=5 // pred_check_branch
        %265 = sbr.rel (%p263) target = $region44
      $region43: #{tpu_custom_call.1} parent=5 // pred_region
        %s266 = ssub.s32 %s12, 2
        // Predicated region
        $region45: #{tpu_custom_call.1} parent=43 // pred_check
          %p267 = pneg %p125
        $region46: #{tpu_custom_call.1} parent=43 // pred_check_branch
          %269 = sbr.rel (%p267) target = $region48
        $region47: #{tpu_custom_call.1} parent=43 // pred_region
          %p270 = scmp.lt.s32.totalorder %s23, 1
          %s271 = scalar_select %p270, %s23, 1
          %p272 = scmp.lt.s32.totalorder %s24, 1
          %s273 = scalar_select %p272, %s24, 1
          %s274 = smul.addr %s271, 2
          %s275 = sadd.s32 %s273, %s274
          %s276 = smul.addr %s275, 4
          %s277 = scalar_lea.vmem %s3, %s276
        $region48: #{tpu_custom_call.1} parent=43 // pred_fallthru
          _
      $region44: #{tpu_custom_call.1} parent=5 // pred_fallthru
        _
    $region6: #{tpu_custom_call.1} parent=1 // loop_footer
      %s16 = sadd.s32 1, %s12
    $region7: #{tpu_custom_call.1} parent=1 // loop_footer_branch
      %11 = sbr.rel target = $region3
    $region8: #{tpu_custom_call.1} parent=1 // loop_exit
      _
    %278 = vsyncpa [#allocation3], 1
    %s279 = scalar_lea.sflag [#allocation3], 1
    %280 = vsyncpa %s279, 1

</llo_original>
